<compile_context>
chip_gen: v7x
topology: tpu7x:2x2x1
jax: 0.10.0
libtpu: 0.0.40
codegen_flags: <defaults>
</compile_context>

<pallas_src>
import jax
import jax.numpy as jnp
from jax.experimental import pallas as pl
from jax.experimental.pallas import tpu as pltpu


def _attention_kernel(v_ref, q_ref, w1v_ref, w1q_ref, b1_ref, w2_ref, b2_ref,
                      out_ref):
    # v_ref : (TB*K, Dv) f32    q_ref : (TB, Dq) f32
    # w1v   : (Dv, H)   bf16    w1q   : (Dq, H)  bf16
    # b1    : (1, H)    f32     w2    : (1, H)   f32
    # b2    : (1,)      f32 SMEM          out   : (TB, K) f32
    TB, K = out_ref.shape
    H = w1v_ref.shape[1]

    # Cast streamed operands to bf16 inside the kernel (VPU cast) so the
    # wrapper needs no separate HBM convert pass; accumulation stays f32.
    v_bf = v_ref[...].astype(jnp.bfloat16)                       # (TB*K, Dv)
    q_bf = q_ref[...].astype(jnp.bfloat16)                       # (TB, Dq)

    # Hidden layer: vq @ W1 + b1, with the concat fused as v@W1v + q@W1q.
    # v-path: single fused-M MXU pass; q-path: one small matmul broadcast
    # over the K objects.
    hv = jnp.dot(v_bf, w1v_ref[...],
                 preferred_element_type=jnp.float32)             # (TB*K, H)
    hq = jnp.dot(q_bf, w1q_ref[...],
                 preferred_element_type=jnp.float32)             # (TB, H)
    hqb = hq + b1_ref[...]                                       # fold b1 once

    # Free layout view when K % 8 == 0 (sublane-aligned K).
    h = hv.reshape(TB, K, H) + hqb[:, None, :]                   # (TB, K, H)
    h = jnp.maximum(h, 0.0)                                      # ReLU (FCNet)

    # Single-output linear: elementwise mul + lane reduce (avoid N=1 matmul).
    logits = jnp.sum(h * w2_ref[...], axis=-1) + b2_ref[0]       # (TB, K)

    # Softmax over the K (object) axis — lane axis, rows independent.
    m = jnp.max(logits, axis=-1, keepdims=True)
    e = jnp.exp(logits - m)
    denom = jnp.sum(e, axis=-1, keepdims=True)
    out_ref[...] = (e * pl.reciprocal(denom, approx=True)).astype(out_ref.dtype)


def _choose_tb(batch, k):
    """Per-step batch tile TB: target TB*K ~= 1024 fused-M rows, 8-aligned
    blocks (or the whole batch), and >=2 grid steps when the batch splits into
    8-aligned halves (so the 'parallel' axis can use v7x's second TC)."""
    target_rows = 1024
    if batch * k <= target_rows:
        if batch % 16 == 0:
            return batch // 2          # two (or more) 8-aligned grid steps
        return batch                   # whole batch in one grid step
    tb = max(1, target_rows // max(k, 1))
    tb = max(8, (tb // 8) * 8)
    return min(tb, batch)


def _vmem_limit_bytes(tb, k, dv, dq, h):
    """Explicit scoped-VMEM budget: double-buffered streamed tiles + resident
    weights + f32 temporaries, with headroom; capped at v7x physical VMEM."""
    f32, bf16 = 4, 2
    est = (2 * tb * k * dv * f32          # v tile (f32 stream, double-buffered)
           + 2 * tb * dq * f32            # q tile
           + (dv + dq) * h * bf16         # resident W1v / W1q (single-buffered)
           + 2 * h * f32                  # b1, w2
           + 2 * tb * k * f32             # output tile
           + tb * k * dv * bf16           # in-kernel bf16 copy of v
           + 3 * tb * k * h * f32)        # hv / h f32 temporaries
    est = int(est * 1.25) + (8 << 20)     # headroom (compiler internal scratch)
    return max(32 << 20, min(est, 64 << 20))


def attention_forward(v, q, w1, b1, w2, b2, *, tb=None):
    """v: [B,K,Dv] f32, q: [B,Dq] f32.
    w1: [Dv+Dq, H] (already transposed, weight-norm applied), b1: [H]
    w2: [1, H] (row of the single-output linear),             b2: [1]
    Returns softmax attention weights [B, K, 1] (f32)."""
    B, K, Dv = v.shape
    Dq = q.shape[1]
    H = w1.shape[1]

    if tb is None:
        tb = _choose_tb(B, K)
    tb = min(tb, B)
    n_steps = (B + tb - 1) // tb   # partial last block: Pallas masks the writes

    # Flatten v in HBM (free, contiguous reshape) so the fused-M matmul needs
    # no in-kernel relayout; stream f32 (cast to bf16 inside the kernel).
    v2d = v.reshape(B * K, Dv).astype(jnp.float32)
    q2d = q.astype(jnp.float32)
    w1v = w1[:Dv, :].astype(jnp.bfloat16)          # (Dv, H)
    w1q = w1[Dv:, :].astype(jnp.bfloat16)          # (Dq, H)
    b1_2d = b1.reshape(1, H).astype(jnp.float32)
    w2_2d = w2.reshape(1, H).astype(jnp.float32)
    b2_1d = b2.reshape(1).astype(jnp.float32)

    vmem_limit = _vmem_limit_bytes(tb, K, Dv, Dq, H)

    def run(weight_pipeline_mode):
        def const_spec(shape):
            # grid-invariant operand: single-buffer it when supported
            if weight_pipeline_mode is None:
                return pl.BlockSpec(shape, lambda b: (0,) * len(shape))
            return pl.BlockSpec(shape, lambda b: (0,) * len(shape),
                                pipeline_mode=weight_pipeline_mode)

        return pl.pallas_call(
            _attention_kernel,
            out_shape=jax.ShapeDtypeStruct((B, K), jnp.float32),
            grid_spec=pltpu.PrefetchScalarGridSpec(
                num_scalar_prefetch=0,
                grid=(n_steps,),
                in_specs=[
                    pl.BlockSpec((tb * K, Dv), lambda b: (b, 0)),   # v (streamed)
                    pl.BlockSpec((tb, Dq),     lambda b: (b, 0)),   # q (streamed)
                    const_spec((Dv, H)),                            # W1_v resident
                    const_spec((Dq, H)),                            # W1_q resident
                    const_spec((1, H)),                             # b1
                    const_spec((1, H)),                             # w2 row
                    pl.BlockSpec(memory_space=pltpu.MemorySpace.SMEM),  # b2
                ],
                out_specs=pl.BlockSpec((tb, K), lambda b: (b, 0)),  # lane = K
            ),
            compiler_params=pltpu.CompilerParams(
                dimension_semantics=("parallel",),      # megacore / 2-TC split
                vmem_limit_bytes=vmem_limit),
        )(v2d, q2d, w1v, w1q, b1_2d, w2_2d, b2_1d)

    try:
        out = run(pl.Buffered(1))       # single-buffer the resident weights
    except Exception:                   # pragma: no cover — pipeline_mode unsupported
        out = run(None)                 # fall back to default double buffering

    return out.reshape(B, K, 1)


def _weight_norm(v_weight, g):
    # nn.utils.weight_norm(..., dim=None): W = g * V / ||V||_F (scalar g)
    return g * v_weight / jnp.sqrt(jnp.sum(v_weight * v_weight))


if __name__ == "__main__":
    # small shapes consistent with the module
    B, K = 2, 8          # batch, num objects
    v_dim, q_dim = 16, 16
    num_hid = 32

    key = jax.random.PRNGKey(0)
    k_v, k_q, k_w1, k_b1, k_w2, k_b2 = jax.random.split(key, 6)

    v = jax.random.normal(k_v, (B, K, v_dim), dtype=jnp.float32)
    q = jax.random.normal(k_q, (B, q_dim), dtype=jnp.float32)

    # deterministic parameter init (weight_norm 'v' tensor + scalar 'g')
    w1_v = jax.random.normal(k_w1, (num_hid, v_dim + q_dim), jnp.float32) * 0.1
    w1_g = jnp.float32(1.3)
    b1 = jax.random.normal(k_b1, (num_hid,), jnp.float32) * 0.1

    w2_v = jax.random.normal(k_w2, (1, num_hid), jnp.float32) * 0.1
    w2_g = jnp.float32(0.7)
    b2 = jax.random.normal(k_b2, (1,), jnp.float32) * 0.1

    # effective (weight-normed) weights; transpose W1 to [in, out]
    w1_eff = _weight_norm(w1_v, w1_g).T          # (v_dim+q_dim, num_hid)
    w2_eff = _weight_norm(w2_v, w2_g)            # (1, num_hid)

    out = attention_forward(v, q, w1_eff, b1, w2_eff, b2)
    out = jax.block_until_ready(out)

    # reference check in plain JAX (f32)
    vq = jnp.concatenate(
        [v, jnp.broadcast_to(q[:, None, :], (B, K, q_dim))], axis=2)
    joint = jnp.maximum(jnp.einsum("bkd,dh->bkh", vq, w1_eff) + b1, 0.0)
    logits = jnp.einsum("bkh,h->bk", joint, w2_eff[0]) + b2[0]
    ref = jax.nn.softmax(logits, axis=1)[..., None]

    assert out.shape == (B, K, 1)
    # bf16 matmul operands + approx reciprocal -> loosened tolerance
    assert jnp.allclose(out, ref, atol=2e-2, rtol=2e-2), (
        float(jnp.max(jnp.abs(out - ref))))

    print("KERNEL_OK")
</pallas_src>

<mosaic_0001>
module attributes {stable_mosaic.version = 11 : i64} {
  func.func @_attention_kernel(%arg0: i32, %arg1: memref<16x16xf32, #tpu.memory_space<vmem>>, %arg2: memref<2x16xf32, #tpu.memory_space<vmem>>, %arg3: memref<16x32xbf16, #tpu.memory_space<vmem>>, %arg4: memref<16x32xbf16, #tpu.memory_space<vmem>>, %arg5: memref<1x32xf32, #tpu.memory_space<vmem>>, %arg6: memref<1x32xf32, #tpu.memory_space<vmem>>, %arg7: memref<1xf32, #tpu.memory_space<smem>>, %arg8: memref<2x8xf32, #tpu.memory_space<vmem>>) attributes {dimension_semantics = [#tpu.dimension_semantics<parallel>], iteration_bounds = array<i64: 1>, scalar_prefetch = 0 : i64, scratch_operands = 0 : i64, tpu.core_type = #tpu.core_type<tc>, window_params = [{transform_indices = @transform_0, window_bounds = array<i64: 16, 16>}, {transform_indices = @transform_1, window_bounds = array<i64: 2, 16>}, {pipeline_mode = #tpu.pipeline_mode<synchronous>, transform_indices = @transform_2, window_bounds = array<i64: 16, 32>}, {pipeline_mode = #tpu.pipeline_mode<synchronous>, transform_indices = @transform_3, window_bounds = array<i64: 16, 32>}, {pipeline_mode = #tpu.pipeline_mode<synchronous>, transform_indices = @transform_4, window_bounds = array<i64: 1, 32>}, {pipeline_mode = #tpu.pipeline_mode<synchronous>, transform_indices = @transform_5, window_bounds = array<i64: 1, 32>}, {transform_indices = @transform_6, window_bounds = array<i64: 1>}, {transform_indices = @transform_7, window_bounds = array<i64: 2, 8>}]} {
    %c0 = arith.constant 0 : index
    %c0_0 = arith.constant 0 : index
    %0 = vector.load %arg1[%c0, %c0_0] : memref<16x16xf32, #tpu.memory_space<vmem>>, vector<16x16xf32>
    %1 = arith.truncf %0 : vector<16x16xf32> to vector<16x16xbf16>
    %c0_1 = arith.constant 0 : index
    %c0_2 = arith.constant 0 : index
    %2 = vector.load %arg2[%c0_1, %c0_2] : memref<2x16xf32, #tpu.memory_space<vmem>>, vector<2x16xf32>
    %3 = arith.truncf %2 : vector<2x16xf32> to vector<2x16xbf16>
    %c0_3 = arith.constant 0 : index
    %c0_4 = arith.constant 0 : index
    %4 = vector.load %arg3[%c0_3, %c0_4] : memref<16x32xbf16, #tpu.memory_space<vmem>>, vector<16x32xbf16>
    %cst = arith.constant dense<0.000000e+00> : vector<16x32xf32>
    %5 = tpu.matmul %1, %4, %cst {dimension_numbers = #tpu.dot_dimension_numbers<[1], [0], [0], [1], [0, 0, 1, 1], [], []>} : vector<16x16xbf16>, vector<16x32xbf16>, vector<16x32xf32> -> vector<16x32xf32>
    %c0_5 = arith.constant 0 : index
    %c0_6 = arith.constant 0 : index
    %6 = vector.load %arg4[%c0_5, %c0_6] : memref<16x32xbf16, #tpu.memory_space<vmem>>, vector<16x32xbf16>
    %cst_7 = arith.constant dense<0.000000e+00> : vector<2x32xf32>
    %7 = tpu.matmul %3, %6, %cst_7 {dimension_numbers = #tpu.dot_dimension_numbers<[1], [0], [0], [1], [0, 0, 1, 1], [], []>} : vector<2x16xbf16>, vector<16x32xbf16>, vector<2x32xf32> -> vector<2x32xf32>
    %c0_8 = arith.constant 0 : index
    %c0_9 = arith.constant 0 : index
    %8 = vector.load %arg5[%c0_8, %c0_9] : memref<1x32xf32, #tpu.memory_space<vmem>>, vector<1x32xf32>
    %9 = vector.broadcast %8 : vector<1x32xf32> to vector<2x32xf32>
    %10 = arith.addf %7, %9 : vector<2x32xf32>
    %11 = vector.shape_cast %5 : vector<16x32xf32> to vector<2x8x32xf32>
    %12 = vector.shape_cast %10 : vector<2x32xf32> to vector<2x1x32xf32>
    %13 = vector.broadcast %12 : vector<2x1x32xf32> to vector<2x8x32xf32>
    %14 = arith.addf %11, %13 : vector<2x8x32xf32>
    %cst_10 = arith.constant 0.000000e+00 : f32
    %15 = vector.broadcast %cst_10 : f32 to vector<2x8x32xf32>
    %16 = arith.maximumf %14, %15 : vector<2x8x32xf32>
    %c0_11 = arith.constant 0 : index
    %c0_12 = arith.constant 0 : index
    %17 = vector.load %arg6[%c0_11, %c0_12] : memref<1x32xf32, #tpu.memory_space<vmem>>, vector<1x32xf32>
    %18 = vector.shape_cast %17 : vector<1x32xf32> to vector<1x1x32xf32>
    %19 = vector.broadcast %18 : vector<1x1x32xf32> to vector<2x8x32xf32>
    %20 = arith.mulf %16, %19 : vector<2x8x32xf32>
    %cst_13 = arith.constant dense<0.000000e+00> : vector<2x8xf32>
    %21 = vector.multi_reduction <add>, %20, %cst_13 [2] : vector<2x8x32xf32> to vector<2x8xf32>
    %c0_14 = arith.constant 0 : index
    %22 = memref.load %arg7[%c0_14] : memref<1xf32, #tpu.memory_space<smem>>
    %23 = vector.broadcast %22 : f32 to vector<2x8xf32>
    %24 = arith.addf %21, %23 : vector<2x8xf32>
    %cst_15 = arith.constant dense<0xFF800000> : vector<2xf32>
    %25 = vector.multi_reduction <maximumf>, %24, %cst_15 [1] : vector<2x8xf32> to vector<2xf32>
    %26 = vector.shape_cast %25 : vector<2xf32> to vector<2x1xf32>
    %27 = vector.broadcast %26 : vector<2x1xf32> to vector<2x8xf32>
    %28 = arith.subf %24, %27 : vector<2x8xf32>
    %29 = math.exp %28 : vector<2x8xf32>
    %cst_16 = arith.constant dense<0.000000e+00> : vector<2xf32>
    %30 = vector.multi_reduction <add>, %29, %cst_16 [1] : vector<2x8xf32> to vector<2xf32>
    %31 = vector.shape_cast %30 : vector<2xf32> to vector<2x1xf32>
    %32 = tpu.reciprocal %31 {approx = true} : vector<2x1xf32> -> vector<2x1xf32>
    %33 = vector.broadcast %32 : vector<2x1xf32> to vector<2x8xf32>
    %34 = arith.mulf %29, %33 : vector<2x8xf32>
    %c0_17 = arith.constant 0 : index
    %c0_18 = arith.constant 0 : index
    %35 = vector.load %arg8[%c0_17, %c0_18] : memref<2x8xf32, #tpu.memory_space<vmem>>, vector<2x8xf32>
    tpu.vector_store %arg8[%c0_17, %c0_18], %34 {strides = array<i32>} : memref<2x8xf32, #tpu.memory_space<vmem>>, vector<2x8xf32>,
    return
  }
  func.func @transform_0(%arg0: i32) -> (i32, i32) {
    %c0_i32 = arith.constant 0 : i32
    %c0_i32_0 = arith.constant 0 : i32
    return %arg0, %c0_i32 : i32, i32
  }
  func.func @transform_1(%arg0: i32) -> (i32, i32) {
    %c0_i32 = arith.constant 0 : i32
    %c0_i32_0 = arith.constant 0 : i32
    return %arg0, %c0_i32 : i32, i32
  }
  func.func @transform_2(%arg0: i32) -> (i32, i32) {
    %c0_i32 = arith.constant 0 : i32
    %c0_i32_0 = arith.constant 0 : i32
    %c0_i32_1 = arith.constant 0 : i32
    return %c0_i32, %c0_i32_0 : i32, i32
  }
  func.func @transform_3(%arg0: i32) -> (i32, i32) {
    %c0_i32 = arith.constant 0 : i32
    %c0_i32_0 = arith.constant 0 : i32
    %c0_i32_1 = arith.constant 0 : i32
    return %c0_i32, %c0_i32_0 : i32, i32
  }
  func.func @transform_4(%arg0: i32) -> (i32, i32) {
    %c0_i32 = arith.constant 0 : i32
    %c0_i32_0 = arith.constant 0 : i32
    %c0_i32_1 = arith.constant 0 : i32
    return %c0_i32, %c0_i32_0 : i32, i32
  }
  func.func @transform_5(%arg0: i32) -> (i32, i32) {
    %c0_i32 = arith.constant 0 : i32
    %c0_i32_0 = arith.constant 0 : i32
    %c0_i32_1 = arith.constant 0 : i32
    return %c0_i32, %c0_i32_0 : i32, i32
  }
  func.func @transform_6(%arg0: i32) -> i32 {
    %c0_i32 = arith.constant 0 : i32
    %c0_i32_0 = arith.constant 0 : i32
    return %c0_i32 : i32
  }
  func.func @transform_7(%arg0: i32) -> (i32, i32) {
    %c0_i32 = arith.constant 0 : i32
    %c0_i32_0 = arith.constant 0 : i32
    return %arg0, %c0_i32 : i32, i32
  }
}

module attributes {stable_mosaic.version = 11 : i64} {
  func.func @_attention_kernel(%arg0: i32, %arg1: memref<16x16xf32, #tpu.memory_space<vmem>>, %arg2: memref<2x16xf32, #tpu.memory_space<vmem>>, %arg3: memref<16x32xbf16, #tpu.memory_space<vmem>>, %arg4: memref<16x32xbf16, #tpu.memory_space<vmem>>, %arg5: memref<1x32xf32, #tpu.memory_space<vmem>>, %arg6: memref<1x32xf32, #tpu.memory_space<vmem>>, %arg7: memref<1xf32, #tpu.memory_space<smem>>, %arg8: memref<2x8xf32, #tpu.memory_space<vmem>>) attributes {dimension_semantics = [#tpu.dimension_semantics<parallel>], iteration_bounds = array<i64: 1>, scalar_prefetch = 0 : i64, scratch_operands = 0 : i64, tpu.core_type = #tpu.core_type<tc>, window_params = [{transform_indices = @transform_0, window_bounds = array<i64: 16, 16>}, {transform_indices = @transform_1, window_bounds = array<i64: 2, 16>}, {pipeline_mode = #tpu.pipeline_mode<synchronous>, transform_indices = @transform_2, window_bounds = array<i64: 16, 32>}, {pipeline_mode = #tpu.pipeline_mode<synchronous>, transform_indices = @transform_3, window_bounds = array<i64: 16, 32>}, {pipeline_mode = #tpu.pipeline_mode<synchronous>, transform_indices = @transform_4, window_bounds = array<i64: 1, 32>}, {pipeline_mode = #tpu.pipeline_mode<synchronous>, transform_indices = @transform_5, window_bounds = array<i64: 1, 32>}, {transform_indices = @transform_6, window_bounds = array<i64: 1>}, {transform_indices = @transform_7, window_bounds = array<i64: 2, 8>}]} {
    %c0 = arith.constant 0 : index
    %c0_0 = arith.constant 0 : index
    %0 = vector.load %arg1[%c0, %c0_0] : memref<16x16xf32, #tpu.memory_space<vmem>>, vector<16x16xf32>
    %1 = arith.truncf %0 : vector<16x16xf32> to vector<16x16xbf16>
    %c0_1 = arith.constant 0 : index
    %c0_2 = arith.constant 0 : index
    %2 = vector.load %arg2[%c0_1, %c0_2] : memref<2x16xf32, #tpu.memory_space<vmem>>, vector<2x16xf32>
    %3 = arith.truncf %2 : vector<2x16xf32> to vector<2x16xbf16>
    %c0_3 = arith.constant 0 : index
    %c0_4 = arith.constant 0 : index
    %4 = vector.load %arg3[%c0_3, %c0_4] : memref<16x32xbf16, #tpu.memory_space<vmem>>, vector<16x32xbf16>
    %cst = arith.constant dense<0.000000e+00> : vector<16x32xf32>
    %5 = tpu.matmul %1, %4, %cst {dimension_numbers = #tpu.dot_dimension_numbers<[1], [0], [0], [1], [0, 0, 1, 1], [], []>} : vector<16x16xbf16>, vector<16x32xbf16>, vector<16x32xf32> -> vector<16x32xf32>
    %c0_5 = arith.constant 0 : index
    %c0_6 = arith.constant 0 : index
    %6 = vector.load %arg4[%c0_5, %c0_6] : memref<16x32xbf16, #tpu.memory_space<vmem>>, vector<16x32xbf16>
    %cst_7 = arith.constant dense<0.000000e+00> : vector<2x32xf32>
    %7 = tpu.matmul %3, %6, %cst_7 {dimension_numbers = #tpu.dot_dimension_numbers<[1], [0], [0], [1], [0, 0, 1, 1], [], []>} : vector<2x16xbf16>, vector<16x32xbf16>, vector<2x32xf32> -> vector<2x32xf32>
    %c0_8 = arith.constant 0 : index
    %c0_9 = arith.constant 0 : index
    %8 = vector.load %arg5[%c0_8, %c0_9] : memref<1x32xf32, #tpu.memory_space<vmem>>, vector<1x32xf32>
    %9 = vector.broadcast %8 : vector<1x32xf32> to vector<2x32xf32>
    %10 = arith.addf %7, %9 : vector<2x32xf32>
    %11 = vector.shape_cast %5 : vector<16x32xf32> to vector<2x8x32xf32>
    %12 = vector.shape_cast %10 : vector<2x32xf32> to vector<2x1x32xf32>
    %13 = vector.broadcast %12 : vector<2x1x32xf32> to vector<2x8x32xf32>
    %14 = arith.addf %11, %13 : vector<2x8x32xf32>
    %cst_10 = arith.constant 0.000000e+00 : f32
    %15 = vector.broadcast %cst_10 : f32 to vector<2x8x32xf32>
    %16 = arith.maximumf %14, %15 : vector<2x8x32xf32>
    %c0_11 = arith.constant 0 : index
    %c0_12 = arith.constant 0 : index
    %17 = vector.load %arg6[%c0_11, %c0_12] : memref<1x32xf32, #tpu.memory_space<vmem>>, vector<1x32xf32>
    %18 = vector.shape_cast %17 : vector<1x32xf32> to vector<1x1x32xf32>
    %19 = vector.broadcast %18 : vector<1x1x32xf32> to vector<2x8x32xf32>
    %20 = arith.mulf %16, %19 : vector<2x8x32xf32>
    %cst_13 = arith.constant dense<0.000000e+00> : vector<2x8xf32>
    %21 = vector.multi_reduction <add>, %20, %cst_13 [2] : vector<2x8x32xf32> to vector<2x8xf32>
    %c0_14 = arith.constant 0 : index
    %22 = memref.load %arg7[%c0_14] : memref<1xf32, #tpu.memory_space<smem>>
    %23 = vector.broadcast %22 : f32 to vector<2x8xf32>
    %24 = arith.addf %21, %23 : vector<2x8xf32>
    %cst_15 = arith.constant dense<0xFF800000> : vector<2xf32>
    %25 = vector.multi_reduction <maximumf>, %24, %cst_15 [1] : vector<2x8xf32> to vector<2xf32>
    %26 = vector.shape_cast %25 : vector<2xf32> to vector<2x1xf32>
    %27 = vector.broadcast %26 : vector<2x1xf32> to vector<2x8xf32>
    %28 = arith.subf %24, %27 : vector<2x8xf32>
    %29 = math.exp %28 : vector<2x8xf32>
    %cst_16 = arith.constant dense<0.000000e+00> : vector<2xf32>
    %30 = vector.multi_reduction <add>, %29, %cst_16 [1] : vector<2x8xf32> to vector<2xf32>
    %31 = vector.shape_cast %30 : vector<2xf32> to vector<2x1xf32>
    %32 = tpu.reciprocal %31 {approx = true} : vector<2x1xf32> -> vector<2x1xf32>
    %33 = vector.broadcast %32 : vector<2x1xf32> to vector<2x8xf32>
    %34 = arith.mulf %29, %33 : vector<2x8xf32>
    %c0_17 = arith.constant 0 : index
    %c0_18 = arith.constant 0 : index
    %35 = vector.load %arg8[%c0_17, %c0_18] : memref<2x8xf32, #tpu.memory_space<vmem>>, vector<2x8xf32>
    tpu.vector_store %arg8[%c0_17, %c0_18], %34 {strides = array<i32>} : memref<2x8xf32, #tpu.memory_space<vmem>>, vector<2x8xf32>,
    return
  }
  func.func @transform_0(%arg0: i32) -> (i32, i32) {
    %c0_i32 = arith.constant 0 : i32
    %c0_i32_0 = arith.constant 0 : i32
    return %arg0, %c0_i32 : i32, i32
  }
  func.func @transform_1(%arg0: i32) -> (i32, i32) {
    %c0_i32 = arith.constant 0 : i32
    %c0_i32_0 = arith.constant 0 : i32
    return %arg0, %c0_i32 : i32, i32
  }
  func.func @transform_2(%arg0: i32) -> (i32, i32) {
    %c0_i32 = arith.constant 0 : i32
    %c0_i32_0 = arith.constant 0 : i32
    %c0_i32_1 = arith.constant 0 : i32
    return %c0_i32, %c0_i32_0 : i32, i32
  }
  func.func @transform_3(%arg0: i32) -> (i32, i32) {
    %c0_i32 = arith.constant 0 : i32
    %c0_i32_0 = arith.constant 0 : i32
    %c0_i32_1 = arith.constant 0 : i32
    return %c0_i32, %c0_i32_0 : i32, i32
  }
  func.func @transform_4(%arg0: i32) -> (i32, i32) {
    %c0_i32 = arith.constant 0 : i32
    %c0_i32_0 = arith.constant 0 : i32
    %c0_i32_1 = arith.constant 0 : i32
    return %c0_i32, %c0_i32_0 : i32, i32
  }
  func.func @transform_5(%arg0: i32) -> (i32, i32) {
    %c0_i32 = arith.constant 0 : i32
    %c0_i32_0 = arith.constant 0 : i32
    %c0_i32_1 = arith.constant 0 : i32
    return %c0_i32, %c0_i32_0 : i32, i32
  }
  func.func @transform_6(%arg0: i32) -> i32 {
    %c0_i32 = arith.constant 0 : i32
    %c0_i32_0 = arith.constant 0 : i32
    return %c0_i32 : i32
  }
  func.func @transform_7(%arg0: i32) -> (i32, i32) {
    %c0_i32 = arith.constant 0 : i32
    %c0_i32_0 = arith.constant 0 : i32
    return %arg0, %c0_i32 : i32, i32
  }
}

</mosaic_0001>

<llo_original>
// kernel: tpu_custom_call.1
$region0: #{tpu_custom_call.1}
  #allocation0 [shape = 'u32[]', space=smem, size = 0x4, offset = 0x4, fixed_abs, tag = 'smem constant byte address 0x4 - core index']
  #allocation1 [shape = 'u32[144,128]{1,0:T(1,128)}', space=vmem, size = 0x12000, scoped, tag = 'internal scratch']
  #allocation2 [shape = 'f32[1]{0:T(128)S(6)}', space=smem, size = 0x200, scoped, tag = 'scoped memory for tpu_custom_call.1']
  %s0 = inlined_call_operand.hbm [shape: f32[16,16], index: 0, kind: input, shape index: {}]
  %s1 = inlined_call_operand.vmem [shape: f32[2,16], index: 1, kind: input, shape index: {}]
  %s2 = inlined_call_operand.vmem [shape: bf16[16,32], index: 2, kind: input, shape index: {}]
  %s3 = inlined_call_operand.hbm [shape: bf16[16,32], index: 3, kind: input, shape index: {}]
  %s4 = inlined_call_operand.vmem [shape: f32[1,32], index: 4, kind: input, shape index: {}]
  %s5 = inlined_call_operand.vmem [shape: f32[1,32], index: 5, kind: input, shape index: {}]
  %s6 = inlined_call_operand.<no memory space> [shape: f32[1], index: 6, kind: input, shape index: {}]
  %s7 = inlined_call_operand.hbm [shape: f32[2,8], index: 7, kind: output, shape index: {}]
  %s8 = sld [smem:[#allocation0]]
  $region46: #{tpu_custom_call.1} parent=0
    _
  %s10 = ssub.s32 1, %s8
  %s11 = scalar_select 0, %s10, %s8
  %12 = sst [smem:[#allocation2]] %s6
  $region1: #{tpu_custom_call.1} parent=0
    #allocation3 [shape = 'u8[8192]{0}', space=vmem, size = 0x2000, scoped, tag = 'input window, operand 0, single buffered']
    #allocation4 [shape = 's32[1]{0}', space=sflag, size = 0x4, scoped, tag = 'scoped memory for tpu_custom_call.1']
    #allocation5 [shape = 's32[1]{0}', space=sflag, size = 0x4, scoped, tag = 'scoped memory for tpu_custom_call.1']
    #allocation6 [shape = 'u8[4096]{0}', space=vmem, size = 0x1000, scoped, tag = 'input window, operand 3, single buffered']
    #allocation7 [shape = 's32[1]{0}', space=sflag, size = 0x4, scoped, tag = 'scoped memory for tpu_custom_call.1']
    #allocation8 [shape = 'u8[1024]{0}', space=vmem, size = 0x400, scoped, tag = 'output window, operand 0, single buffered']
    %13 = vsyncpa [#allocation4], 0
    %14 = vsyncpa [#allocation7], 0
    %15 = vsyncpa [#allocation5], 0
    // Predicated region
    $region2: #{tpu_custom_call.1} parent=1 // pred_check
      _
    $region3: #{tpu_custom_call.1} parent=1 // pred_check_branch
      %17 = sbr.rel (0) target = $region5
    $region4: #{tpu_custom_call.1} parent=1 // pred_region
      %s19 = ssub.s32 256, 256
      %20 = vsyncadd [#allocation4], %s19
      %s21 = sshll.u32 [#allocation3], 4
      %s22 = int_to_ptr.vmem [resolvable:$true] %s21
      %27 = dma.hbm_to_vmem [thread:$0]  %s0, 256, %s22, [#allocation4], 128, 128, 8
    $region5: #{tpu_custom_call.1} parent=1 // pred_fallthru
      _
    // Predicated region
    $region6: #{tpu_custom_call.1} parent=1 // pred_check
      _
    $region7: #{tpu_custom_call.1} parent=1 // pred_check_branch
      %29 = sbr.rel (0) target = $region9
    $region8: #{tpu_custom_call.1} parent=1 // pred_region
      _
    $region9: #{tpu_custom_call.1} parent=1 // pred_fallthru
      _
    // Predicated region
    $region10: #{tpu_custom_call.1} parent=1 // pred_check
      _
    $region11: #{tpu_custom_call.1} parent=1 // pred_check_branch
      %31 = sbr.rel (0) target = $region13
    $region12: #{tpu_custom_call.1} parent=1 // pred_region
      _
    $region13: #{tpu_custom_call.1} parent=1 // pred_fallthru
      _
    // Predicated region
    $region14: #{tpu_custom_call.1} parent=1 // pred_check
      _
    $region15: #{tpu_custom_call.1} parent=1 // pred_check_branch
      %33 = sbr.rel (0) target = $region17
    $region16: #{tpu_custom_call.1} parent=1 // pred_region
      %s35 = ssub.s32 128, 128
      %36 = vsyncadd [#allocation7], %s35
      %s37 = sshll.u32 [#allocation6], 4
      %s38 = int_to_ptr.vmem [resolvable:$true] %s37
      %43 = dma.hbm_to_vmem [thread:$0]  %s3, 128, %s38, [#allocation7], 64, 64, 4
    $region17: #{tpu_custom_call.1} parent=1 // pred_fallthru
      _
    // Predicated region
    $region18: #{tpu_custom_call.1} parent=1 // pred_check
      _
    $region19: #{tpu_custom_call.1} parent=1 // pred_check_branch
      %45 = sbr.rel (0) target = $region21
    $region20: #{tpu_custom_call.1} parent=1 // pred_region
      _
    $region21: #{tpu_custom_call.1} parent=1 // pred_fallthru
      _
    // Predicated region
    $region22: #{tpu_custom_call.1} parent=1 // pred_check
      _
    $region23: #{tpu_custom_call.1} parent=1 // pred_check_branch
      %47 = sbr.rel (0) target = $region25
    $region24: #{tpu_custom_call.1} parent=1 // pred_region
      _
    $region25: #{tpu_custom_call.1} parent=1 // pred_fallthru
      _
    // Predicated region
    $region26: #{tpu_custom_call.1} parent=1 // pred_check
      _
    $region27: #{tpu_custom_call.1} parent=1 // pred_check_branch
      %49 = sbr.rel (0) target = $region29
    $region28: #{tpu_custom_call.1} parent=1 // pred_region
      _
    $region29: #{tpu_custom_call.1} parent=1 // pred_fallthru
      _
    // Predicated region
    $region30: #{tpu_custom_call.1} parent=1 // pred_check
      _
    $region31: #{tpu_custom_call.1} parent=1 // pred_check_branch
      %51 = sbr.rel (0) target = $region33
    $region32: #{tpu_custom_call.1} parent=1 // pred_region
      %52 = dma.done [#allocation4], 256
    $region33: #{tpu_custom_call.1} parent=1 // pred_fallthru
      _
    // Predicated region
    $region34: #{tpu_custom_call.1} parent=1 // pred_check
      _
    $region35: #{tpu_custom_call.1} parent=1 // pred_check_branch
      %54 = sbr.rel (0) target = $region37
    $region36: #{tpu_custom_call.1} parent=1 // pred_region
      %55 = dma.done [#allocation7], 128
    $region37: #{tpu_custom_call.1} parent=1 // pred_fallthru
      _
    %v57 = vld [vmem:[#allocation3] sm:$0xff]
    %v58 = vld [vmem:[#allocation3 + $0x8] sm:$0xff]
    %v59 = vpack.c.bf16 %v58, %v57
    %v60 = vld [vmem:[%s1] sm:$0x3]
    %v61 = vpack.c.bf16 %v60, %v60
    %v62 = vld [vmem:[%s2] sm:$0xf]
    %v63 = vld [vmem:[%s2 + $0x4] sm:$0xf]
    %v66 = vunpack.c.l.b16 %v62
    %v67 = vunpack.c.l.b16 %v63
    %v68 = vpack.c.b16 %v67, %v66
    %vm70 = vcmask 130048
    %v72 = vsel %vm70, %v59, 0
    %74 = vmatprep.subr.bf16.mxu0 0
    %75 = vmatpush1.bf16.msra.mxu0 %v68
    %76 = vmatprep.subr.bf16.mxu0 0
    %77 = vmatpush1.bf16.msra.mxu0 0
    %78 = vmatprep.subr.bf16.mxu0 0
    %79 = vmatpush1.bf16.msra.mxu0 0
    %80 = vmatprep.subr.bf16.mxu0 0
    %81 = vmatpush1.bf16.msra.mxu0 0
    %82 = vmatprep.subr.bf16.mxu0 0
    %83 = vmatpush1.bf16.msra.mxu0 0
    %84 = vmatprep.subr.bf16.mxu0 0
    %85 = vmatpush1.bf16.msra.mxu0 0
    %86 = vmatprep.subr.bf16.mxu0 0
    %87 = vmatpush1.bf16.msra.mxu0 0
    %88 = vmatprep.subr.bf16.mxu0 0
    %89 = vmatpush1.bf16.msra.mxu0 0
    %90 = vmatprep.subr.bf16.mxu0 0
    %91 = vmatpush1.bf16.msra.mxu0 0
    %92 = vmatprep.subr.bf16.mxu0 0
    %93 = vmatpush1.bf16.msra.mxu0 0
    %94 = vmatprep.subr.bf16.mxu0 0
    %95 = vmatpush1.bf16.msra.mxu0 0
    %96 = vmatprep.subr.bf16.mxu0 0
    %97 = vmatpush1.bf16.msra.mxu0 0
    %98 = vmatprep.subr.bf16.mxu0 0
    %99 = vmatpush1.bf16.msra.mxu0 0
    %100 = vmatprep.subr.bf16.mxu0 0
    %101 = vmatpush1.bf16.msra.mxu0 0
    %102 = vmatprep.subr.bf16.mxu0 0
    %103 = vmatpush1.bf16.msra.mxu0 0
    %104 = vmatprep.subr.bf16.mxu0 0
    %105 = vmatpush1.bf16.msra.mxu0 0
    %106 = vmatprep.mubr.bf16.mxu0 0
    %107 = vmatmul.mubr.bf16.gmra.mrb[0].mxu0 %v72
    %v108 = vpop.f32.mrb[0].mxu0
    %v109 = vadd.f32 0.0, %v108
    %v110 = vpop.f32.mrb[0].mxu0
    %v111 = vpop.f32.mrb[0].mxu0
    %v112 = vadd.f32 0.0, %v111
    %v113 = vpop.f32.mrb[0].mxu0
    %114 = vdwg.mxu0
    %v115 = vld [vmem:[#allocation6] sm:$0xf]
    %v116 = vld [vmem:[#allocation6 + $0x4] sm:$0xf]
    %v117 = vld [vmem:[%s4] sm:$0x1]
    %v119 = vlaneseq
    %v120 = vshrl.u32 %v119, 7
    %v121 = vsub.s32 0, %v120
    %v122 = vrot.slane %v117, %v121
    %v126 = vunpack.c.l.b16 %v115
    %v127 = vunpack.c.l.b16 %v116
    %v128 = vpack.c.b16 %v127, %v126
    %v131 = vsel %vm70, %v61, 0
    %133 = vmatprep.subr.bf16.mxu0 0
    %134 = vmatpush1.bf16.msra.mxu0 %v128
    %135 = vmatprep.subr.bf16.mxu0 0
    %136 = vmatpush1.bf16.msra.mxu0 0
    %137 = vmatprep.subr.bf16.mxu0 0
    %138 = vmatpush1.bf16.msra.mxu0 0
    %139 = vmatprep.subr.bf16.mxu0 0
    %140 = vmatpush1.bf16.msra.mxu0 0
    %141 = vmatprep.subr.bf16.mxu0 0
    %142 = vmatpush1.bf16.msra.mxu0 0
    %143 = vmatprep.subr.bf16.mxu0 0
    %144 = vmatpush1.bf16.msra.mxu0 0
    %145 = vmatprep.subr.bf16.mxu0 0
    %146 = vmatpush1.bf16.msra.mxu0 0
    %147 = vmatprep.subr.bf16.mxu0 0
    %148 = vmatpush1.bf16.msra.mxu0 0
    %149 = vmatprep.subr.bf16.mxu0 0
    %150 = vmatpush1.bf16.msra.mxu0 0
    %151 = vmatprep.subr.bf16.mxu0 0
    %152 = vmatpush1.bf16.msra.mxu0 0
    %153 = vmatprep.subr.bf16.mxu0 0
    %154 = vmatpush1.bf16.msra.mxu0 0
    %155 = vmatprep.subr.bf16.mxu0 0
    %156 = vmatpush1.bf16.msra.mxu0 0
    %157 = vmatprep.subr.bf16.mxu0 0
    %158 = vmatpush1.bf16.msra.mxu0 0
    %159 = vmatprep.subr.bf16.mxu0 0
    %160 = vmatpush1.bf16.msra.mxu0 0
    %161 = vmatprep.subr.bf16.mxu0 0
    %162 = vmatpush1.bf16.msra.mxu0 0
    %163 = vmatprep.subr.bf16.mxu0 0
    %164 = vmatpush1.bf16.msra.mxu0 0
    %165 = vmatprep.mubr.bf16.mxu0 0
    %166 = vmatmul.mubr.bf16.gmra.mrb[0].mxu0 %v131
    %v167 = vpop.f32.mrb[0].mxu0
    %v168 = vadd.f32 %v122, %v167
    %v169 = vpop.f32.mrb[0].mxu0
    %v170 = vpop.f32.mrb[0].mxu0
    %v171 = vpop.f32.mrb[0].mxu0
    %172 = vdwg.mxu0
    %v175 = vunpack.c.l.s4 1966171168
    %v176 = vunpack.c.0.s8 %v175
    %v177 = vlaneseq
    %v178 = vshrl.u32 %v177, 7
    %v179 = vsub.s32 %v176, %v178
    %v180 = vrot.slane %v168, %v179
    %v181 = vcombine.high %v180, %v180
    %v183 = vunpack.c.l.s4 1966171168
    %v184 = vunpack.c.0.s8 %v183
    %v185 = vlaneseq
    %v186 = vshrl.u32 %v185, 7
    %v187 = vsub.s32 %v184, %v186
    %v188 = vrot.slane %v180, %v187
    %v190 = vunpack.c.l.s4 1966171168
    %v191 = vunpack.c.0.s8 %v190
    %v192 = vlaneseq
    %v193 = vshrl.u32 %v192, 7
    %v194 = vsub.s32 %v191, %v193
    %v195 = vrot.slane %v181, %v194
    %v196 = vlaneseq
    %v197 = vshrl.u32 %v196, 7
    %v198 = vsub.s32 0, %v197
    %v199 = vrot.slane %v188, %v198
    %v200 = vlaneseq
    %v201 = vshrl.u32 %v200, 7
    %v202 = vsub.s32 0, %v201
    %v203 = vrot.slane %v195, %v202
    %v206 = vadd.f32 %v109, %v199
    %v207 = vadd.f32 %v112, %v203
    %v208 = vmax.f32 %v206, 0.0
    %v209 = vmax.f32 %v207, 0.0
    %v210 = vld [vmem:[%s5] sm:$0x1]
    %v212 = vlaneseq
    %v213 = vshrl.u32 %v212, 7
    %v214 = vsub.s32 0, %v213
    %v215 = vrot.slane %v210, %v214
    %v217 = vmul.f32 %v208, %v215
    %v218 = vmul.f32 %v209, %v215
    %vm219 = vcmask 261120
    %v220 = vsel %vm219, %v217, 0.0
    %221 = vadd.xlane.f32.xlu0 %v220
    %v222 = vpop.xlane.xlu0 %221
    %v223 = vsel %vm219, %v218, 0.0
    %224 = vadd.xlane.f32.xlu0 %v223
    %v225 = vpop.xlane.xlu0 %224
    %s226 = sld [smem:[#allocation2]]
    %v227 = vstv %s226
    %v228 = vadd.f32 %v222, %v227
    %v229 = vadd.f32 %v225, %v227
    %v232 = vlaneseq
    %v233 = vand.u32 %v232, 127
    %v234 = vlaneseq
    %v235 = vshrl.u32 %v234, 7
    %v236 = vsub.s32 %v233, %v235
    %v237 = vrot.slane %v228, %v236
    %v238 = vlaneseq
    %v239 = vshrl.u32 %v238, 7
    %v240 = vsub.s32 %v233, %v239
    %v241 = vrot.slane %v229, %v240
    %vm242 = vcmask 1041409
    %v243 = vsel %vm242, %v241, %v237
    %vm245 = vcmask 58368
    %v246 = vsel %vm245, %v243, -inf
    %247 = vmax.xlane.f32.xlu0 %v246
    %v248 = vpop.xlane.xlu0 %247
    %v250 = vlaneseq
    %v251 = vshrl.u32 %v250, 7
    %v252 = vsub.s32 0, %v251
    %v253 = vrot.slane %v248, %v252
    %v254 = vlaneseq
    %v255 = vshrl.u32 %v254, 7
    %v256 = vsub.s32 1, %v255
    %v257 = vrot.slane %v248, %v256
    %v260 = vsub.f32 %v228, %v253
    %v261 = vsub.f32 %v229, %v257
    %v262 = vmul.f32 %v260, 1.442695
    %v263 = vpow.pop %v262
    %v264 = vmul.f32 %v261, 1.442695
    %v265 = vpow.pop %v264
    %268 = vset.pattern.permute.xlu0 0
    %269 = vperm.xlu0 %268, %v263
    %v270 = vpop.permute.xlu0 %269
    %271 = vset.pattern.permute.xlu0 0
    %272 = vperm.xlu0 %271, %v265
    %v273 = vpop.permute.xlu0 %272
    %v274 = vlaneseq
    %v275 = vshrl.u32 %v274, 7
    %v276 = vsub.s32 %v233, %v275
    %v277 = vrot.slane %v270, %v276
    %v278 = vlaneseq
    %v279 = vshrl.u32 %v278, 7
    %v280 = vsub.s32 %v233, %v279
    %v281 = vrot.slane %v273, %v280
    %v282 = vsel %vm242, %v281, %v277
    %v284 = vsel %vm245, %v282, 0.0
    %285 = vadd.xlane.f32.xlu0 %v284
    %v286 = vpop.xlane.xlu0 %285
    %v287 = vrcp.pop %v286
    %v289 = vlaneseq
    %v290 = vshrl.u32 %v289, 7
    %v291 = vsub.s32 0, %v290
    %v292 = vrot.slane %v287, %v291
    %v293 = vlaneseq
    %v294 = vshrl.u32 %v293, 7
    %v295 = vsub.s32 1, %v294
    %v296 = vrot.slane %v287, %v295
    %v299 = vmul.f32 %v263, %v292
    %v300 = vmul.f32 %v265, %v296
    %303 = vset.pattern.permute.xlu0 0
    %304 = vperm.xlu0 %303, %v299
    %v305 = vpop.permute.xlu0 %304
    %306 = vset.pattern.permute.xlu0 0
    %307 = vperm.xlu0 %306, %v300
    %v308 = vpop.permute.xlu0 %307
    %v309 = vlaneseq
    %v310 = vshrl.u32 %v309, 7
    %v311 = vsub.s32 %v233, %v310
    %v312 = vrot.slane %v305, %v311
    %v313 = vlaneseq
    %v314 = vshrl.u32 %v313, 7
    %v315 = vsub.s32 %v233, %v314
    %v316 = vrot.slane %v308, %v315
    %v317 = vsel %vm242, %v316, %v312
    %319 = vst.msk [vmem:[#allocation8] sm:$0x3] %vm245, %v317
    // Predicated region
    $region38: #{tpu_custom_call.1} parent=1 // pred_check
      _
    $region39: #{tpu_custom_call.1} parent=1 // pred_check_branch
      %321 = sbr.rel (0) target = $region41
    $region40: #{tpu_custom_call.1} parent=1 // pred_region
      %s323 = ssub.s32 32, 32
      %324 = vsyncadd [#allocation5], %s323
      %s326 = sshll.u32 [#allocation8], 4
      %s327 = int_to_ptr.vmem [resolvable:$true] %s326
      %329 = dma.vmem_to_hbm [thread:$0]  %s327, 32, %s7, [#allocation5]
    $region41: #{tpu_custom_call.1} parent=1 // pred_fallthru
      _
    // Predicated region
    $region42: #{tpu_custom_call.1} parent=1 // pred_check
      _
    $region43: #{tpu_custom_call.1} parent=1 // pred_check_branch
      %331 = sbr.rel (0) target = $region45
    $region44: #{tpu_custom_call.1} parent=1 // pred_region
      %332 = dma.done [#allocation5], 32
    $region45: #{tpu_custom_call.1} parent=1 // pred_fallthru
      _
    %333 = vsyncpa [#allocation4], 1
    %334 = vsyncpa [#allocation7], 1
    %335 = vsyncpa [#allocation5], 1

// kernel: tpu_custom_call.1
$region0: #{tpu_custom_call.1}
  #allocation0 [shape = 'u32[]', space=smem, size = 0x4, offset = 0x4, fixed_abs, tag = 'smem constant byte address 0x4 - core index']
  #allocation1 [shape = 'u32[144,128]{1,0:T(1,128)}', space=vmem, size = 0x12000, scoped, tag = 'internal scratch']
  #allocation2 [shape = 'f32[1]{0:T(128)S(6)}', space=smem, size = 0x200, scoped, tag = 'scoped memory for tpu_custom_call.1']
  %s0 = inlined_call_operand.hbm [shape: f32[16,16], index: 0, kind: input, shape index: {}]
  %s1 = inlined_call_operand.vmem [shape: f32[2,16], index: 1, kind: input, shape index: {}]
  %s2 = inlined_call_operand.vmem [shape: bf16[16,32], index: 2, kind: input, shape index: {}]
  %s3 = inlined_call_operand.hbm [shape: bf16[16,32], index: 3, kind: input, shape index: {}]
  %s4 = inlined_call_operand.vmem [shape: f32[1,32], index: 4, kind: input, shape index: {}]
  %s5 = inlined_call_operand.vmem [shape: f32[1,32], index: 5, kind: input, shape index: {}]
  %s6 = inlined_call_operand.<no memory space> [shape: f32[1], index: 6, kind: input, shape index: {}]
  %s7 = inlined_call_operand.hbm [shape: f32[2,8], index: 7, kind: output, shape index: {}]
  %s8 = sld [smem:[#allocation0]]
  $region46: #{tpu_custom_call.1} parent=0
    _
  %s10 = ssub.s32 1, %s8
  %s11 = scalar_select 0, %s10, %s8
  %12 = sst [smem:[#allocation2]] %s6
  $region1: #{tpu_custom_call.1} parent=0
    #allocation3 [shape = 'u8[8192]{0}', space=vmem, size = 0x2000, scoped, tag = 'input window, operand 0, single buffered']
    #allocation4 [shape = 's32[1]{0}', space=sflag, size = 0x4, scoped, tag = 'scoped memory for tpu_custom_call.1']
    #allocation5 [shape = 's32[1]{0}', space=sflag, size = 0x4, scoped, tag = 'scoped memory for tpu_custom_call.1']
    #allocation6 [shape = 'u8[4096]{0}', space=vmem, size = 0x1000, scoped, tag = 'input window, operand 3, single buffered']
    #allocation7 [shape = 's32[1]{0}', space=sflag, size = 0x4, scoped, tag = 'scoped memory for tpu_custom_call.1']
    #allocation8 [shape = 'u8[1024]{0}', space=vmem, size = 0x400, scoped, tag = 'output window, operand 0, single buffered']
    %13 = vsyncpa [#allocation4], 0
    %14 = vsyncpa [#allocation7], 0
    %15 = vsyncpa [#allocation5], 0
    // Predicated region
    $region2: #{tpu_custom_call.1} parent=1 // pred_check
      _
    $region3: #{tpu_custom_call.1} parent=1 // pred_check_branch
      %17 = sbr.rel (0) target = $region5
    $region4: #{tpu_custom_call.1} parent=1 // pred_region
      %s19 = ssub.s32 256, 256
      %20 = vsyncadd [#allocation4], %s19
      %s21 = sshll.u32 [#allocation3], 4
      %s22 = int_to_ptr.vmem [resolvable:$true] %s21
      %27 = dma.hbm_to_vmem [thread:$0]  %s0, 256, %s22, [#allocation4], 128, 128, 8
    $region5: #{tpu_custom_call.1} parent=1 // pred_fallthru
      _
    // Predicated region
    $region6: #{tpu_custom_call.1} parent=1 // pred_check
      _
    $region7: #{tpu_custom_call.1} parent=1 // pred_check_branch
      %29 = sbr.rel (0) target = $region9
    $region8: #{tpu_custom_call.1} parent=1 // pred_region
      _
    $region9: #{tpu_custom_call.1} parent=1 // pred_fallthru
      _
    // Predicated region
    $region10: #{tpu_custom_call.1} parent=1 // pred_check
      _
    $region11: #{tpu_custom_call.1} parent=1 // pred_check_branch
      %31 = sbr.rel (0) target = $region13
    $region12: #{tpu_custom_call.1} parent=1 // pred_region
      _
    $region13: #{tpu_custom_call.1} parent=1 // pred_fallthru
      _
    // Predicated region
    $region14: #{tpu_custom_call.1} parent=1 // pred_check
      _
    $region15: #{tpu_custom_call.1} parent=1 // pred_check_branch
      %33 = sbr.rel (0) target = $region17
    $region16: #{tpu_custom_call.1} parent=1 // pred_region
      %s35 = ssub.s32 128, 128
      %36 = vsyncadd [#allocation7], %s35
      %s37 = sshll.u32 [#allocation6], 4
      %s38 = int_to_ptr.vmem [resolvable:$true] %s37
      %43 = dma.hbm_to_vmem [thread:$0]  %s3, 128, %s38, [#allocation7], 64, 64, 4
    $region17: #{tpu_custom_call.1} parent=1 // pred_fallthru
      _
    // Predicated region
    $region18: #{tpu_custom_call.1} parent=1 // pred_check
      _
    $region19: #{tpu_custom_call.1} parent=1 // pred_check_branch
      %45 = sbr.rel (0) target = $region21
    $region20: #{tpu_custom_call.1} parent=1 // pred_region
      _
    $region21: #{tpu_custom_call.1} parent=1 // pred_fallthru
      _
    // Predicated region
    $region22: #{tpu_custom_call.1} parent=1 // pred_check
      _
    $region23: #{tpu_custom_call.1} parent=1 // pred_check_branch
      %47 = sbr.rel (0) target = $region25
    $region24: #{tpu_custom_call.1} parent=1 // pred_region
      _
    $region25: #{tpu_custom_call.1} parent=1 // pred_fallthru
      _
    // Predicated region
    $region26: #{tpu_custom_call.1} parent=1 // pred_check
      _
    $region27: #{tpu_custom_call.1} parent=1 // pred_check_branch
      %49 = sbr.rel (0) target = $region29
    $region28: #{tpu_custom_call.1} parent=1 // pred_region
      _
    $region29: #{tpu_custom_call.1} parent=1 // pred_fallthru
      _
    // Predicated region
    $region30: #{tpu_custom_call.1} parent=1 // pred_check
      _
    $region31: #{tpu_custom_call.1} parent=1 // pred_check_branch
      %51 = sbr.rel (0) target = $region33
    $region32: #{tpu_custom_call.1} parent=1 // pred_region
      %52 = dma.done [#allocation4], 256
    $region33: #{tpu_custom_call.1} parent=1 // pred_fallthru
      _
    // Predicated region
    $region34: #{tpu_custom_call.1} parent=1 // pred_check
      _
    $region35: #{tpu_custom_call.1} parent=1 // pred_check_branch
      %54 = sbr.rel (0) target = $region37
    $region36: #{tpu_custom_call.1} parent=1 // pred_region
      %55 = dma.done [#allocation7], 128
    $region37: #{tpu_custom_call.1} parent=1 // pred_fallthru
      _
    %v57 = vld [vmem:[#allocation3] sm:$0xff]
    %v58 = vld [vmem:[#allocation3 + $0x8] sm:$0xff]
    %v59 = vpack.c.bf16 %v58, %v57
    %v60 = vld [vmem:[%s1] sm:$0x3]
    %v61 = vpack.c.bf16 %v60, %v60
    %v62 = vld [vmem:[%s2] sm:$0xf]
    %v63 = vld [vmem:[%s2 + $0x4] sm:$0xf]
    %v66 = vunpack.c.l.b16 %v62
    %v67 = vunpack.c.l.b16 %v63
    %v68 = vpack.c.b16 %v67, %v66
    %vm70 = vcmask 130048
    %v72 = vsel %vm70, %v59, 0
    %74 = vmatprep.subr.bf16.mxu0 0
    %75 = vmatpush1.bf16.msra.mxu0 %v68
    %76 = vmatprep.subr.bf16.mxu0 0
    %77 = vmatpush1.bf16.msra.mxu0 0
    %78 = vmatprep.subr.bf16.mxu0 0
    %79 = vmatpush1.bf16.msra.mxu0 0
    %80 = vmatprep.subr.bf16.mxu0 0
    %81 = vmatpush1.bf16.msra.mxu0 0
    %82 = vmatprep.subr.bf16.mxu0 0
    %83 = vmatpush1.bf16.msra.mxu0 0
    %84 = vmatprep.subr.bf16.mxu0 0
    %85 = vmatpush1.bf16.msra.mxu0 0
    %86 = vmatprep.subr.bf16.mxu0 0
    %87 = vmatpush1.bf16.msra.mxu0 0
    %88 = vmatprep.subr.bf16.mxu0 0
    %89 = vmatpush1.bf16.msra.mxu0 0
    %90 = vmatprep.subr.bf16.mxu0 0
    %91 = vmatpush1.bf16.msra.mxu0 0
    %92 = vmatprep.subr.bf16.mxu0 0
    %93 = vmatpush1.bf16.msra.mxu0 0
    %94 = vmatprep.subr.bf16.mxu0 0
    %95 = vmatpush1.bf16.msra.mxu0 0
    %96 = vmatprep.subr.bf16.mxu0 0
    %97 = vmatpush1.bf16.msra.mxu0 0
    %98 = vmatprep.subr.bf16.mxu0 0
    %99 = vmatpush1.bf16.msra.mxu0 0
    %100 = vmatprep.subr.bf16.mxu0 0
    %101 = vmatpush1.bf16.msra.mxu0 0
    %102 = vmatprep.subr.bf16.mxu0 0
    %103 = vmatpush1.bf16.msra.mxu0 0
    %104 = vmatprep.subr.bf16.mxu0 0
    %105 = vmatpush1.bf16.msra.mxu0 0
    %106 = vmatprep.mubr.bf16.mxu0 0
    %107 = vmatmul.mubr.bf16.gmra.mrb[0].mxu0 %v72
    %v108 = vpop.f32.mrb[0].mxu0
    %v109 = vadd.f32 0.0, %v108
    %v110 = vpop.f32.mrb[0].mxu0
    %v111 = vpop.f32.mrb[0].mxu0
    %v112 = vadd.f32 0.0, %v111
    %v113 = vpop.f32.mrb[0].mxu0
    %114 = vdwg.mxu0
    %v115 = vld [vmem:[#allocation6] sm:$0xf]
    %v116 = vld [vmem:[#allocation6 + $0x4] sm:$0xf]
    %v117 = vld [vmem:[%s4] sm:$0x1]
    %v119 = vlaneseq
    %v120 = vshrl.u32 %v119, 7
    %v121 = vsub.s32 0, %v120
    %v122 = vrot.slane %v117, %v121
    %v126 = vunpack.c.l.b16 %v115
    %v127 = vunpack.c.l.b16 %v116
    %v128 = vpack.c.b16 %v127, %v126
    %v131 = vsel %vm70, %v61, 0
    %133 = vmatprep.subr.bf16.mxu0 0
    %134 = vmatpush1.bf16.msra.mxu0 %v128
    %135 = vmatprep.subr.bf16.mxu0 0
    %136 = vmatpush1.bf16.msra.mxu0 0
    %137 = vmatprep.subr.bf16.mxu0 0
    %138 = vmatpush1.bf16.msra.mxu0 0
    %139 = vmatprep.subr.bf16.mxu0 0
    %140 = vmatpush1.bf16.msra.mxu0 0
    %141 = vmatprep.subr.bf16.mxu0 0
    %142 = vmatpush1.bf16.msra.mxu0 0
    %143 = vmatprep.subr.bf16.mxu0 0
    %144 = vmatpush1.bf16.msra.mxu0 0
    %145 = vmatprep.subr.bf16.mxu0 0
    %146 = vmatpush1.bf16.msra.mxu0 0
    %147 = vmatprep.subr.bf16.mxu0 0
    %148 = vmatpush1.bf16.msra.mxu0 0
    %149 = vmatprep.subr.bf16.mxu0 0
    %150 = vmatpush1.bf16.msra.mxu0 0
    %151 = vmatprep.subr.bf16.mxu0 0
    %152 = vmatpush1.bf16.msra.mxu0 0
    %153 = vmatprep.subr.bf16.mxu0 0
    %154 = vmatpush1.bf16.msra.mxu0 0
    %155 = vmatprep.subr.bf16.mxu0 0
    %156 = vmatpush1.bf16.msra.mxu0 0
    %157 = vmatprep.subr.bf16.mxu0 0
    %158 = vmatpush1.bf16.msra.mxu0 0
    %159 = vmatprep.subr.bf16.mxu0 0
    %160 = vmatpush1.bf16.msra.mxu0 0
    %161 = vmatprep.subr.bf16.mxu0 0
    %162 = vmatpush1.bf16.msra.mxu0 0
    %163 = vmatprep.subr.bf16.mxu0 0
    %164 = vmatpush1.bf16.msra.mxu0 0
    %165 = vmatprep.mubr.bf16.mxu0 0
    %166 = vmatmul.mubr.bf16.gmra.mrb[0].mxu0 %v131
    %v167 = vpop.f32.mrb[0].mxu0
    %v168 = vadd.f32 %v122, %v167
    %v169 = vpop.f32.mrb[0].mxu0
    %v170 = vpop.f32.mrb[0].mxu0
    %v171 = vpop.f32.mrb[0].mxu0
    %172 = vdwg.mxu0
    %v175 = vunpack.c.l.s4 1966171168
    %v176 = vunpack.c.0.s8 %v175
    %v177 = vlaneseq
    %v178 = vshrl.u32 %v177, 7
    %v179 = vsub.s32 %v176, %v178
    %v180 = vrot.slane %v168, %v179
    %v181 = vcombine.high %v180, %v180
    %v183 = vunpack.c.l.s4 1966171168
    %v184 = vunpack.c.0.s8 %v183
    %v185 = vlaneseq
    %v186 = vshrl.u32 %v185, 7
    %v187 = vsub.s32 %v184, %v186
    %v188 = vrot.slane %v180, %v187
    %v190 = vunpack.c.l.s4 1966171168
    %v191 = vunpack.c.0.s8 %v190
    %v192 = vlaneseq
    %v193 = vshrl.u32 %v192, 7
    %v194 = vsub.s32 %v191, %v193
    %v195 = vrot.slane %v181, %v194
    %v196 = vlaneseq
    %v197 = vshrl.u32 %v196, 7
    %v198 = vsub.s32 0, %v197
    %v199 = vrot.slane %v188, %v198
    %v200 = vlaneseq
    %v201 = vshrl.u32 %v200, 7
    %v202 = vsub.s32 0, %v201
    %v203 = vrot.slane %v195, %v202
    %v206 = vadd.f32 %v109, %v199
    %v207 = vadd.f32 %v112, %v203
    %v208 = vmax.f32 %v206, 0.0
    %v209 = vmax.f32 %v207, 0.0
    %v210 = vld [vmem:[%s5] sm:$0x1]
    %v212 = vlaneseq
    %v213 = vshrl.u32 %v212, 7
    %v214 = vsub.s32 0, %v213
    %v215 = vrot.slane %v210, %v214
    %v217 = vmul.f32 %v208, %v215
    %v218 = vmul.f32 %v209, %v215
    %vm219 = vcmask 261120
    %v220 = vsel %vm219, %v217, 0.0
    %221 = vadd.xlane.f32.xlu0 %v220
    %v222 = vpop.xlane.xlu0 %221
    %v223 = vsel %vm219, %v218, 0.0
    %224 = vadd.xlane.f32.xlu0 %v223
    %v225 = vpop.xlane.xlu0 %224
    %s226 = sld [smem:[#allocation2]]
    %v227 = vstv %s226
    %v228 = vadd.f32 %v222, %v227
    %v229 = vadd.f32 %v225, %v227
    %v232 = vlaneseq
    %v233 = vand.u32 %v232, 127
    %v234 = vlaneseq
    %v235 = vshrl.u32 %v234, 7
    %v236 = vsub.s32 %v233, %v235
    %v237 = vrot.slane %v228, %v236
    %v238 = vlaneseq
    %v239 = vshrl.u32 %v238, 7
    %v240 = vsub.s32 %v233, %v239
    %v241 = vrot.slane %v229, %v240
    %vm242 = vcmask 1041409
    %v243 = vsel %vm242, %v241, %v237
    %vm245 = vcmask 58368
    %v246 = vsel %vm245, %v243, -inf
    %247 = vmax.xlane.f32.xlu0 %v246
    %v248 = vpop.xlane.xlu0 %247
    %v250 = vlaneseq
    %v251 = vshrl.u32 %v250, 7
    %v252 = vsub.s32 0, %v251
    %v253 = vrot.slane %v248, %v252
    %v254 = vlaneseq
    %v255 = vshrl.u32 %v254, 7
    %v256 = vsub.s32 1, %v255
    %v257 = vrot.slane %v248, %v256
    %v260 = vsub.f32 %v228, %v253
    %v261 = vsub.f32 %v229, %v257
    %v262 = vmul.f32 %v260, 1.442695
    %v263 = vpow.pop %v262
    %v264 = vmul.f32 %v261, 1.442695
    %v265 = vpow.pop %v264
    %268 = vset.pattern.permute.xlu0 0
    %269 = vperm.xlu0 %268, %v263
    %v270 = vpop.permute.xlu0 %269
    %271 = vset.pattern.permute.xlu0 0
    %272 = vperm.xlu0 %271, %v265
    %v273 = vpop.permute.xlu0 %272
    %v274 = vlaneseq
    %v275 = vshrl.u32 %v274, 7
    %v276 = vsub.s32 %v233, %v275
    %v277 = vrot.slane %v270, %v276
    %v278 = vlaneseq
    %v279 = vshrl.u32 %v278, 7
    %v280 = vsub.s32 %v233, %v279
    %v281 = vrot.slane %v273, %v280
    %v282 = vsel %vm242, %v281, %v277
    %v284 = vsel %vm245, %v282, 0.0
    %285 = vadd.xlane.f32.xlu0 %v284
    %v286 = vpop.xlane.xlu0 %285
    %v287 = vrcp.pop %v286
    %v289 = vlaneseq
    %v290 = vshrl.u32 %v289, 7
    %v291 = vsub.s32 0, %v290
    %v292 = vrot.slane %v287, %v291
    %v293 = vlaneseq
    %v294 = vshrl.u32 %v293, 7
    %v295 = vsub.s32 1, %v294
    %v296 = vrot.slane %v287, %v295
    %v299 = vmul.f32 %v263, %v292
    %v300 = vmul.f32 %v265, %v296
    %303 = vset.pattern.permute.xlu0 0
    %304 = vperm.xlu0 %303, %v299
    %v305 = vpop.permute.xlu0 %304
    %306 = vset.pattern.permute.xlu0 0
    %307 = vperm.xlu0 %306, %v300
    %v308 = vpop.permute.xlu0 %307
    %v309 = vlaneseq
    %v310 = vshrl.u32 %v309, 7
    %v311 = vsub.s32 %v233, %v310
    %v312 = vrot.slane %v305, %v311
    %v313 = vlaneseq
    %v314 = vshrl.u32 %v313, 7
    %v315 = vsub.s32 %v233, %v314
    %v316 = vrot.slane %v308, %v315
    %v317 = vsel %vm242, %v316, %v312
    %319 = vst.msk [vmem:[#allocation8] sm:$0x3] %vm245, %v317
    // Predicated region
    $region38: #{tpu_custom_call.1} parent=1 // pred_check
      _
    $region39: #{tpu_custom_call.1} parent=1 // pred_check_branch
      %321 = sbr.rel (0) target = $region41
    $region40: #{tpu_custom_call.1} parent=1 // pred_region
      %s323 = ssub.s32 32, 32
      %324 = vsyncadd [#allocation5], %s323
      %s326 = sshll.u32 [#allocation8], 4
      %s327 = int_to_ptr.vmem [resolvable:$true] %s326
      %329 = dma.vmem_to_hbm [thread:$0]  %s327, 32, %s7, [#allocation5]
    $region41: #{tpu_custom_call.1} parent=1 // pred_fallthru
      _
    // Predicated region
    $region42: #{tpu_custom_call.1} parent=1 // pred_check
      _
    $region43: #{tpu_custom_call.1} parent=1 // pred_check_branch
      %331 = sbr.rel (0) target = $region45
    $region44: #{tpu_custom_call.1} parent=1 // pred_region
      %332 = dma.done [#allocation5], 32
    $region45: #{tpu_custom_call.1} parent=1 // pred_fallthru
      _
    %333 = vsyncpa [#allocation4], 1
    %334 = vsyncpa [#allocation7], 1
    %335 = vsyncpa [#allocation5], 1

</llo_original>
